<compile_context>
chip_gen: v5e
topology: v5e:2x2
jax: 0.10.0
libtpu: 0.0.40
codegen_flags: <defaults>
</compile_context>

<pallas_src>
import functools

import jax
import jax.numpy as jnp
from jax.experimental import pallas as pl
from jax.experimental.pallas import tpu as pltpu


def _round_up(x, m):
    return ((x + m - 1) // m) * m


def _fused_linear_kernel(x_ref, w_ref, b_ref, out_ref):
    # x: (TB, K)   w: (K, 2N)   b: (1, 2N)   out: (TB, 2N)
    acc = jnp.dot(x_ref[...], w_ref[...], preferred_element_type=jnp.float32)
    out_ref[...] = (acc + b_ref[...]).astype(out_ref.dtype)


def prepare_linear_policy_params(w_mean, b_mean, w_log_std, b_log_std):
    """One-time parameter preparation (do NOT call per forward step).

    w_*: (num_actions, num_inputs)  PyTorch nn.Linear layout
    b_*: (num_actions,)
    Returns:
      w_fused: (num_inputs, 2*num_actions)   [mean cols | log_std cols]
      b_fused: (1, 2*num_actions)
    """
    wm_t = jnp.asarray(w_mean, jnp.float32).T           # (K, N)
    ws_t = jnp.asarray(w_log_std, jnp.float32).T        # (K, N)
    w_fused = jnp.concatenate([wm_t, ws_t], axis=1)     # (K, 2N)
    b_fused = jnp.concatenate(
        [jnp.asarray(b_mean, jnp.float32), jnp.asarray(b_log_std, jnp.float32)],
        axis=0).reshape(1, -1)                          # (1, 2N)
    return w_fused, b_fused


@functools.partial(jax.jit, static_argnames=("num_actions", "block_b"))
def linear_policy_forward(state, w_fused, b_fused, *, num_actions,
                          block_b=512):
    """state:   (B, num_inputs) f32
       w_fused: (num_inputs, 2*num_actions) f32   (from prepare_*)
       b_fused: (1, 2*num_actions) f32
       returns (mean, log_std), each (B, num_actions) f32
    """
    x = jnp.asarray(state, jnp.float32)
    B, K = x.shape
    N2 = w_fused.shape[1]
    assert N2 == 2 * num_actions

    # Batch tile: multiple of 8 (sublane), capped at block_b.
    TB = min(block_b, _round_up(B, 8))
    Bp = _round_up(B, TB)
    if Bp != B:
        x = jnp.pad(x, ((0, Bp - B), (0, 0)))

    grid = (Bp // TB,)

    fused = pl.pallas_call(
        _fused_linear_kernel,
        out_shape=jax.ShapeDtypeStruct((Bp, N2), jnp.float32),
        grid_spec=pltpu.PrefetchScalarGridSpec(
            num_scalar_prefetch=0,
            grid=grid,
            in_specs=[
                pl.BlockSpec((TB, K), lambda i: (i, 0)),   # activations: tiled
                pl.BlockSpec((K, N2), lambda i: (0, 0)),   # fused weight: resident
                pl.BlockSpec((1, N2), lambda i: (0, 0)),   # fused bias: resident
            ],
            out_specs=pl.BlockSpec((TB, N2), lambda i: (i, 0)),
        ),
        compiler_params=pltpu.CompilerParams(
            dimension_semantics=("parallel",)),            # shards on v7x's 2 TCs
    )(x, w_fused, b_fused)

    fused = fused[:B]
    mean = fused[:, :num_actions]
    log_std = fused[:, num_actions:]
    return mean, log_std


def init_linear_policy_params(key, num_inputs, num_actions, *, zeroed=True):
    """Init matching LinearPolicy.__init__: nn.Linear-style uniform
    +/- 1/sqrt(fan_in), then multiplied by 0.0 (as the module does) when
    zeroed=True.  zeroed=False gives non-trivial params for testing."""
    k1, k2, k3, k4 = jax.random.split(key, 4)
    bound = 1.0 / jnp.sqrt(jnp.float32(num_inputs))
    w_mean = jax.random.uniform(k1, (num_actions, num_inputs), jnp.float32,
                                -bound, bound)
    b_mean = jax.random.uniform(k2, (num_actions,), jnp.float32, -bound, bound)
    w_log_std = jax.random.uniform(k3, (num_actions, num_inputs), jnp.float32,
                                   -bound, bound)
    b_log_std = jax.random.uniform(k4, (num_actions,), jnp.float32,
                                   -bound, bound)
    if zeroed:
        # Reproduce: self.*.weight.data.mul_(0.0); self.*.bias.data.mul_(0.0)
        w_mean = w_mean * 0.0
        b_mean = b_mean * 0.0
        w_log_std = w_log_std * 0.0
        b_log_std = b_log_std * 0.0
    return w_mean, b_mean, w_log_std, b_log_std


if __name__ == "__main__":
    key = jax.random.PRNGKey(0)
    batch, num_inputs, num_actions = 8, 32, 8

    k_state, k_params = jax.random.split(key)
    state = jax.random.normal(k_state, (batch, num_inputs), jnp.float32)

    # --- 1) Real coverage: NON-zero params so the matmul path is validated ---
    w_mean, b_mean, w_log_std, b_log_std = init_linear_policy_params(
        k_params, num_inputs, num_actions, zeroed=False)
    w_fused, b_fused = prepare_linear_policy_params(
        w_mean, b_mean, w_log_std, b_log_std)

    mean, log_std = linear_policy_forward(
        state, w_fused, b_fused, num_actions=num_actions)
    jax.block_until_ready((mean, log_std))

    mean_ref = state @ w_mean.T + b_mean
    logstd_ref = state @ w_log_std.T + b_log_std
    assert mean.shape == (batch, num_actions)
    assert log_std.shape == (batch, num_actions)
    assert jnp.allclose(mean, mean_ref, atol=1e-5)
    assert jnp.allclose(log_std, logstd_ref, atol=1e-5)

    # --- 2) Module-faithful zeroed init (as LinearPolicy.__init__ does) ---
    wz_mean, bz_mean, wz_log_std, bz_log_std = init_linear_policy_params(
        k_params, num_inputs, num_actions, zeroed=True)
    wz_fused, bz_fused = prepare_linear_policy_params(
        wz_mean, bz_mean, wz_log_std, bz_log_std)
    mean_z, log_std_z = linear_policy_forward(
        state, wz_fused, bz_fused, num_actions=num_actions)
    jax.block_until_ready((mean_z, log_std_z))
    assert jnp.allclose(mean_z, jnp.zeros_like(mean_z))
    assert jnp.allclose(log_std_z, jnp.zeros_like(log_std_z))

    # --- 3) Non-aligned / larger batch exercising the grid + padding path ---
    big_state = jax.random.normal(k_state, (1000, num_inputs), jnp.float32)
    mean_b, log_std_b = linear_policy_forward(
        big_state, w_fused, b_fused, num_actions=num_actions, block_b=256)
    jax.block_until_ready((mean_b, log_std_b))
    assert jnp.allclose(mean_b, big_state @ w_mean.T + b_mean, atol=1e-4)
    assert jnp.allclose(log_std_b, big_state @ w_log_std.T + b_log_std,
                        atol=1e-4)

    print("KERNEL_OK")
</pallas_src>

<mosaic_0001>
module attributes {stable_mosaic.version = 11 : i64} {
  func.func @_fused_linear_kernel(%arg0: i32, %arg1: memref<8x32xf32, #tpu.memory_space<vmem>>, %arg2: memref<32x16xf32, #tpu.memory_space<vmem>>, %arg3: memref<1x16xf32, #tpu.memory_space<vmem>>, %arg4: memref<8x16xf32, #tpu.memory_space<vmem>>) attributes {dimension_semantics = [#tpu.dimension_semantics<parallel>], iteration_bounds = array<i64: 1>, scalar_prefetch = 0 : i64, scratch_operands = 0 : i64, tpu.core_type = #tpu.core_type<tc>, window_params = [{transform_indices = @transform_0, window_bounds = array<i64: 8, 32>}, {pipeline_mode = #tpu.pipeline_mode<synchronous>, transform_indices = @transform_1, window_bounds = array<i64: 32, 16>}, {pipeline_mode = #tpu.pipeline_mode<synchronous>, transform_indices = @transform_2, window_bounds = array<i64: 1, 16>}, {transform_indices = @transform_3, window_bounds = array<i64: 8, 16>}]} {
    %c0 = arith.constant 0 : index
    %c0_0 = arith.constant 0 : index
    %0 = vector.load %arg1[%c0, %c0_0] : memref<8x32xf32, #tpu.memory_space<vmem>>, vector<8x32xf32>
    %c0_1 = arith.constant 0 : index
    %c0_2 = arith.constant 0 : index
    %1 = vector.load %arg2[%c0_1, %c0_2] : memref<32x16xf32, #tpu.memory_space<vmem>>, vector<32x16xf32>
    %cst = arith.constant dense<0.000000e+00> : vector<8x16xf32>
    %2 = tpu.matmul %0, %1, %cst {dimension_numbers = #tpu.dot_dimension_numbers<[1], [0], [0], [1], [0, 0, 1, 1], [], []>} : vector<8x32xf32>, vector<32x16xf32>, vector<8x16xf32> -> vector<8x16xf32>
    %c0_3 = arith.constant 0 : index
    %c0_4 = arith.constant 0 : index
    %3 = vector.load %arg3[%c0_3, %c0_4] : memref<1x16xf32, #tpu.memory_space<vmem>>, vector<1x16xf32>
    %4 = vector.broadcast %3 : vector<1x16xf32> to vector<8x16xf32>
    %5 = arith.addf %2, %4 : vector<8x16xf32>
    %c0_5 = arith.constant 0 : index
    %c0_6 = arith.constant 0 : index
    %6 = vector.load %arg4[%c0_5, %c0_6] : memref<8x16xf32, #tpu.memory_space<vmem>>, vector<8x16xf32>
    tpu.vector_store %arg4[%c0_5, %c0_6], %5 {strides = array<i32>} : memref<8x16xf32, #tpu.memory_space<vmem>>, vector<8x16xf32>,
    return
  }
  func.func @transform_0(%arg0: i32) -> (i32, i32) {
    %c0_i32 = arith.constant 0 : i32
    %c0_i32_0 = arith.constant 0 : i32
    return %arg0, %c0_i32 : i32, i32
  }
  func.func @transform_1(%arg0: i32) -> (i32, i32) {
    %c0_i32 = arith.constant 0 : i32
    %c0_i32_0 = arith.constant 0 : i32
    %c0_i32_1 = arith.constant 0 : i32
    return %c0_i32, %c0_i32_0 : i32, i32
  }
  func.func @transform_2(%arg0: i32) -> (i32, i32) {
    %c0_i32 = arith.constant 0 : i32
    %c0_i32_0 = arith.constant 0 : i32
    %c0_i32_1 = arith.constant 0 : i32
    return %c0_i32, %c0_i32_0 : i32, i32
  }
  func.func @transform_3(%arg0: i32) -> (i32, i32) {
    %c0_i32 = arith.constant 0 : i32
    %c0_i32_0 = arith.constant 0 : i32
    return %arg0, %c0_i32 : i32, i32
  }
}

</mosaic_0001>

<llo_original>
// kernel: linear_policy_forward.1
$region0: #{linear_policy_forward.1}
  #allocation0 [shape = 'u32[]', space=smem, size = 0x4, offset = 0x4, fixed_abs, tag = 'smem constant byte address 0x4 - core index']
  #allocation1 [shape = 'u32[72,128]{1,0:T(1,128)}', space=vmem, size = 0x9000, scoped, tag = 'internal scratch']
  %s0 = inlined_call_operand.vmem [shape: f32[8,32], index: 0, kind: input, shape index: {}]
  %s1 = inlined_call_operand.vmem [shape: f32[32,16], index: 1, kind: input, shape index: {}]
  %s2 = inlined_call_operand.vmem [shape: f32[1,16], index: 2, kind: input, shape index: {}]
  %s3 = inlined_call_operand.vmem [shape: f32[8,16], index: 3, kind: output, shape index: {}]
  %s4 = sld [smem:[#allocation0]]
  $region22: #{linear_policy_forward.1} parent=0
    _
  %s6 = ssub.s32 1, %s4
  %s7 = scalar_select 0, %s6, %s4
  // Predicated region
  $region2: #{linear_policy_forward.1} parent=0 // pred_check
    _
  $region3: #{linear_policy_forward.1} parent=0 // pred_check_branch
    %9 = sbr.rel (0) target = $region5
  $region4: #{linear_policy_forward.1} parent=0 // pred_region
    _
  $region5: #{linear_policy_forward.1} parent=0 // pred_fallthru
    _
  // Predicated region
  $region6: #{linear_policy_forward.1} parent=0 // pred_check
    _
  $region7: #{linear_policy_forward.1} parent=0 // pred_check_branch
    %11 = sbr.rel (0) target = $region9
  $region8: #{linear_policy_forward.1} parent=0 // pred_region
    _
  $region9: #{linear_policy_forward.1} parent=0 // pred_fallthru
    _
  // Predicated region
  $region10: #{linear_policy_forward.1} parent=0 // pred_check
    _
  $region11: #{linear_policy_forward.1} parent=0 // pred_check_branch
    %13 = sbr.rel (0) target = $region13
  $region12: #{linear_policy_forward.1} parent=0 // pred_region
    _
  $region13: #{linear_policy_forward.1} parent=0 // pred_fallthru
    _
  %v14 = vld [vmem:[%s0] sm:$0xff]
  %v15 = vld [vmem:[%s1] sm:$0xff]
  %v16 = vld [vmem:[%s1 + $0x8] sm:$0xff]
  %v17 = vld [vmem:[%s1 + $0x10] sm:$0xff]
  %v18 = vld [vmem:[%s1 + $0x18] sm:$0xff]
  %v19 = vld [vmem:[%s2] sm:$0x1]
  %v21 = vperm.slane %v19, 0
  %vm23 = vcmask 261120
  %v25 = vsel %vm23, %v14, 0
  %27 = vmatpush.msra.mxu0 0.0
  %28 = vmatpush.msra.mxu0 0.0
  %29 = vmatpush.msra.mxu0 0.0
  %30 = vmatpush.msra.mxu0 0.0
  %31 = vmatpush.msra.mxu0 0.0
  %32 = vmatpush.msra.mxu0 0.0
  %33 = vmatpush.msra.mxu0 0.0
  %34 = vmatpush.msra.mxu0 0.0
  %35 = vmatpush.msra.mxu0 0.0
  %36 = vmatpush.msra.mxu0 0.0
  %37 = vmatpush.msra.mxu0 0.0
  %38 = vmatpush.msra.mxu0 0.0
  %39 = vmatpush.msra.mxu0 %v18
  %40 = vmatpush.msra.mxu0 %v17
  %41 = vmatpush.msra.mxu0 %v16
  %42 = vmatpush.msra.mxu0 %v15
  %43 = vmatmul.f32.gmra.mxu0 %v25
  %v44 = vpop.f32.mrf.mxu0
  %v45 = vadd.f32 %v21, %v44
  %46 = vdwg.mxu0
  %vm47 = vcmask 130048
  %48 = vst.msk [vmem:[%s3] sm:$0xff] %vm47, %v45
  // Predicated region
  $region14: #{linear_policy_forward.1} parent=0 // pred_check
    _
  $region15: #{linear_policy_forward.1} parent=0 // pred_check_branch
    %50 = sbr.rel (0) target = $region17
  $region16: #{linear_policy_forward.1} parent=0 // pred_region
    _
  $region17: #{linear_policy_forward.1} parent=0 // pred_fallthru
    _
  // Predicated region
  $region18: #{linear_policy_forward.1} parent=0 // pred_check
    _
  $region19: #{linear_policy_forward.1} parent=0 // pred_check_branch
    %52 = sbr.rel (0) target = $region21
  $region20: #{linear_policy_forward.1} parent=0 // pred_region
    _
  $region21: #{linear_policy_forward.1} parent=0 // pred_fallthru
    _

</llo_original>
